<compile_context>
chip_gen: v7x
topology: tpu7x:2x2x1
jax: 0.10.0
libtpu: 0.0.40
codegen_flags: <defaults>
</compile_context>

<pallas_src>
import jax
import jax.numpy as jnp
from jax.experimental import pallas as pl
from jax.experimental.pallas import tpu as pltpu

_SQRT_2_OVER_PI = 0.7978845608028654


def _gelu_tanh(x):
    # tanh-form GELU: tanh lowers to the EUP (separate bundle slot), keeping VALU load low.
    return 0.5 * x * (1.0 + jnp.tanh(_SQRT_2_OVER_PI * (x + 0.044715 * (x * x * x))))


def block_kernel(x_ref, w1_ref, b1_ref, w2_ref, b2_ref, o_ref):
    # x_ref:  (tm, C)  f32 rows of the flattened (B*L, C) input (channel-last, lane-dense)
    # w1_ref: (C, H)   bf16 folded weight  (diag(s1) @ filt @ diag(s2) @ fc1.weight^T)
    # b1_ref: (1, H)   f32 folded bias
    # w2_ref: (H, C)   bf16 fc2.weight^T
    # b2_ref: (1, C)   f32 fc2.bias
    # o_ref:  (tm, C)  f32
    x = x_ref[...]

    # fc1 (with norm1/filter/norm2 folded in): single-pass bf16 MXU, f32 accumulate.
    h = jnp.dot(x.astype(jnp.bfloat16), w1_ref[...],
                preferred_element_type=jnp.float32) + b1_ref[...]
    h = _gelu_tanh(h)

    # fc2
    z = jnp.dot(h.astype(jnp.bfloat16), w2_ref[...],
                preferred_element_type=jnp.float32) + b2_ref[...]

    # residual
    o_ref[...] = x + z


def block_pallas(x, params, eps=1e-5):
    """x: (B, L, C). params: dict of torch-layout parameters (see __main__)."""
    B, L, C = x.shape
    H = params["w_fc1"].shape[0]
    hi = jax.lax.Precision.HIGHEST  # one-time tiny host-side folds: keep them exact

    # Fold eval-mode BatchNorms into per-channel scale/shift.
    # TODO(synk): BatchNorm1d training-mode (batch-statistics) normalization is not implemented;
    # eval-mode running-stats semantics are used.
    s1 = params["g1"] / jnp.sqrt(params["rv1"] + eps)
    t1 = params["beta1"] - params["rm1"] * s1
    s2 = params["g2"] / jnp.sqrt(params["rv2"] + eps)
    t2 = params["beta2"] - params["rm2"] * s2

    # Spectral gating (rfft * rfft(weight) -> irfft, all 'ortho') == circular convolution of the
    # channel axis with w, scaled by 1/sqrt(C):  filt[c, m] = w[(m - c) mod C] / sqrt(C),
    # applied as (channel-last row) @ filt.
    wv = params["w_spec"].reshape(C)
    idx = (jnp.arange(C)[None, :] - jnp.arange(C)[:, None]) % C
    filt = (wv[idx] * (1.0 / (C ** 0.5))).astype(jnp.float32)

    # Fold norm1 + filter + norm2 into fc1:
    #   W_eff = diag(s1) @ filt @ diag(s2) @ W1^T,   b_eff = b1 + ((t1 @ filt) * s2 + t2) @ W1^T
    w1t = params["w_fc1"].T                                           # (C, H)
    mid = (s1[:, None] * filt) * s2[None, :]                          # (C, C)
    w_eff = jnp.dot(mid, w1t, precision=hi)                           # (C, H)
    tb = jnp.dot(t1, filt, precision=hi) * s2 + t2                    # (C,)
    b_eff = params["b_fc1"] + jnp.dot(tb, w1t, precision=hi)          # (H,)

    w_eff = w_eff.astype(jnp.bfloat16)
    w2t = params["w_fc2"].T.astype(jnp.bfloat16)                      # (H, C)
    b1 = b_eff.reshape(1, H).astype(jnp.float32)
    b2 = params["b_fc2"].reshape(1, C).astype(jnp.float32)

    # Flatten to a lane-dense (B*L, C) slab; tile the row axis (pad rows, never a giant tile).
    rows = B * L
    x2 = x.reshape(rows, C)
    TM = 256
    if rows <= TM:
        tm = ((rows + 7) // 8) * 8          # single tile, sublane-aligned
        rows_p = tm
    else:
        tm = TM
        rows_p = ((rows + tm - 1) // tm) * tm
    if rows_p != rows:
        x2 = jnp.pad(x2, ((0, rows_p - rows), (0, 0)))
    grid = (rows_p // tm,)

    out2 = pl.pallas_call(
        block_kernel,
        out_shape=jax.ShapeDtypeStruct((rows_p, C), x.dtype),
        grid_spec=pltpu.PrefetchScalarGridSpec(
            num_scalar_prefetch=0,
            grid=grid,
            in_specs=[
                pl.BlockSpec((tm, C), lambda i: (i, 0)),   # x rows
                pl.BlockSpec((C, H), lambda i: (0, 0)),    # folded fc1 weight (bf16)
                pl.BlockSpec((1, H), lambda i: (0, 0)),    # folded fc1 bias
                pl.BlockSpec((H, C), lambda i: (0, 0)),    # fc2 weight^T (bf16)
                pl.BlockSpec((1, C), lambda i: (0, 0)),    # fc2 bias
            ],
            out_specs=pl.BlockSpec((tm, C), lambda i: (i, 0)),
        ),
        compiler_params=pltpu.CompilerParams(
            dimension_semantics=("parallel",),
        ),
    )(x2, w_eff, b1, w2t, b2)

    return out2[:rows].reshape(B, L, C)


def block_reference(x, params, eps=1e-5):
    """Pure-JAX reference mirroring the PyTorch forward (FFT path, eval-mode BN, exact GELU)."""
    B, L, C = x.shape
    hi = jax.lax.Precision.HIGHEST

    def bn(z_bcl, g, b, rm, rv):
        inv = 1.0 / jnp.sqrt(rv + eps)
        return (z_bcl - rm[None, :, None]) * inv[None, :, None] * g[None, :, None] \
            + b[None, :, None]

    # norm1: Transpose(1,2) then BatchNorm1d
    z = jnp.transpose(x, (0, 2, 1))                                   # (B, C, L)
    z = bn(z, params["g1"], params["beta1"], params["rm1"], params["rv1"])

    # SpectralGatingNetwork
    zf = z.astype(jnp.float32)
    X = jnp.fft.rfft(zf, axis=1, norm="ortho")                        # (B, C//2+1, L)
    W = jnp.fft.rfft(params["w_spec"], axis=1, norm="ortho")          # (1, C//2+1)
    Xp = jnp.transpose(X, (0, 2, 1))                                  # (B, L, C//2+1)
    Y = Xp * W
    out = jnp.fft.irfft(Y, n=C, axis=-1, norm="ortho")                # (B, L, C)
    out = jnp.transpose(out, (0, 2, 1))                               # (B, C, L)

    # norm2: BatchNorm1d then Transpose(1,2)
    z2 = bn(out, params["g2"], params["beta2"], params["rm2"], params["rv2"])
    z2 = jnp.transpose(z2, (0, 2, 1))                                 # (B, L, C)

    # MLP (dropout p=0)
    h = jnp.dot(z2, params["w_fc1"].T, precision=hi) + params["b_fc1"]
    h = jax.nn.gelu(h, approximate=False)
    z3 = jnp.dot(h, params["w_fc2"].T, precision=hi) + params["b_fc2"]
    return x + z3


if __name__ == "__main__":
    # Small shapes consistent with the module: dim=128 (lane-dense), seq=16, batch=2, hidden=4*dim.
    B, L, C = 2, 16, 128
    H = int(C * 4.0)
    eps = 1e-5

    key = jax.random.PRNGKey(0)
    ks = jax.random.split(key, 16)

    x = jax.random.normal(ks[0], (B, L, C), dtype=jnp.float32)

    params = {
        # norm1 (BatchNorm1d)
        "g1": jax.random.uniform(ks[1], (C,), jnp.float32, 0.5, 1.5),
        "beta1": jax.random.normal(ks[2], (C,), jnp.float32) * 0.1,
        "rm1": jax.random.normal(ks[3], (C,), jnp.float32) * 0.1,
        "rv1": jax.random.uniform(ks[4], (C,), jnp.float32, 0.5, 1.5),
        # norm2 (BatchNorm1d)
        "g2": jax.random.uniform(ks[5], (C,), jnp.float32, 0.5, 1.5),
        "beta2": jax.random.normal(ks[6], (C,), jnp.float32) * 0.1,
        "rm2": jax.random.normal(ks[7], (C,), jnp.float32) * 0.1,
        "rv2": jax.random.uniform(ks[8], (C,), jnp.float32, 0.5, 1.5),
        # SpectralGatingNetwork weight (torch: randn(1, dim) * 0.02, real-valued)
        "w_spec": jax.random.normal(ks[9], (1, C), jnp.float32) * 0.02,
        # MLP (torch Linear layout: weight is (out, in))
        "w_fc1": jax.random.uniform(ks[10], (H, C), jnp.float32, -1.0 / C ** 0.5, 1.0 / C ** 0.5),
        "b_fc1": jax.random.uniform(ks[11], (H,), jnp.float32, -1.0 / C ** 0.5, 1.0 / C ** 0.5),
        "w_fc2": jax.random.uniform(ks[12], (C, H), jnp.float32, -1.0 / H ** 0.5, 1.0 / H ** 0.5),
        "b_fc2": jax.random.uniform(ks[13], (C,), jnp.float32, -1.0 / H ** 0.5, 1.0 / H ** 0.5),
    }

    out = block_pallas(x, params, eps=eps)
    out = jax.block_until_ready(out)

    ref = block_reference(x, params, eps=eps)
    assert out.shape == (B, L, C)
    assert jnp.allclose(out, ref, atol=1e-3, rtol=1e-3), "mismatch vs reference"

    print("KERNEL_OK")
</pallas_src>

<mosaic_0001>
module attributes {stable_mosaic.version = 11 : i64} {
  func.func @block_kernel(%arg0: i32, %arg1: memref<32x128xf32, #tpu.memory_space<vmem>>, %arg2: memref<128x512xbf16, #tpu.memory_space<vmem>>, %arg3: memref<1x512xf32, #tpu.memory_space<vmem>>, %arg4: memref<512x128xbf16, #tpu.memory_space<vmem>>, %arg5: memref<1x128xf32, #tpu.memory_space<vmem>>, %arg6: memref<32x128xf32, #tpu.memory_space<vmem>>) attributes {dimension_semantics = [#tpu.dimension_semantics<parallel>], iteration_bounds = array<i64: 1>, scalar_prefetch = 0 : i64, scratch_operands = 0 : i64, tpu.core_type = #tpu.core_type<tc>, window_params = [{transform_indices = @transform_0, window_bounds = array<i64: 32, 128>}, {pipeline_mode = #tpu.pipeline_mode<synchronous>, transform_indices = @transform_1, window_bounds = array<i64: 128, 512>}, {pipeline_mode = #tpu.pipeline_mode<synchronous>, transform_indices = @transform_2, window_bounds = array<i64: 1, 512>}, {pipeline_mode = #tpu.pipeline_mode<synchronous>, transform_indices = @transform_3, window_bounds = array<i64: 512, 128>}, {pipeline_mode = #tpu.pipeline_mode<synchronous>, transform_indices = @transform_4, window_bounds = array<i64: 1, 128>}, {transform_indices = @transform_5, window_bounds = array<i64: 32, 128>}]} {
    %c0 = arith.constant 0 : index
    %c0_0 = arith.constant 0 : index
    %0 = vector.load %arg1[%c0, %c0_0] : memref<32x128xf32, #tpu.memory_space<vmem>>, vector<32x128xf32>
    %1 = arith.truncf %0 : vector<32x128xf32> to vector<32x128xbf16>
    %c0_1 = arith.constant 0 : index
    %c0_2 = arith.constant 0 : index
    %2 = vector.load %arg2[%c0_1, %c0_2] : memref<128x512xbf16, #tpu.memory_space<vmem>>, vector<128x512xbf16>
    %cst = arith.constant dense<0.000000e+00> : vector<32x512xf32>
    %3 = tpu.matmul %1, %2, %cst {dimension_numbers = #tpu.dot_dimension_numbers<[1], [0], [0], [1], [0, 0, 1, 1], [], []>} : vector<32x128xbf16>, vector<128x512xbf16>, vector<32x512xf32> -> vector<32x512xf32>
    %c0_3 = arith.constant 0 : index
    %c0_4 = arith.constant 0 : index
    %4 = vector.load %arg3[%c0_3, %c0_4] : memref<1x512xf32, #tpu.memory_space<vmem>>, vector<1x512xf32>
    %5 = vector.broadcast %4 : vector<1x512xf32> to vector<32x512xf32>
    %6 = arith.addf %3, %5 : vector<32x512xf32>
    %cst_5 = arith.constant 5.000000e-01 : f32
    %7 = vector.broadcast %cst_5 : f32 to vector<32x512xf32>
    %8 = arith.mulf %7, %6 : vector<32x512xf32>
    %9 = arith.mulf %6, %6 : vector<32x512xf32>
    %10 = arith.mulf %9, %6 : vector<32x512xf32>
    %cst_6 = arith.constant 4.471500e-02 : f32
    %11 = vector.broadcast %cst_6 : f32 to vector<32x512xf32>
    %12 = arith.mulf %11, %10 : vector<32x512xf32>
    %13 = arith.addf %6, %12 : vector<32x512xf32>
    %cst_7 = arith.constant 0.797884583 : f32
    %14 = vector.broadcast %cst_7 : f32 to vector<32x512xf32>
    %15 = arith.mulf %14, %13 : vector<32x512xf32>
    %16 = math.tanh %15 : vector<32x512xf32>
    %cst_8 = arith.constant 1.000000e+00 : f32
    %17 = vector.broadcast %cst_8 : f32 to vector<32x512xf32>
    %18 = arith.addf %17, %16 : vector<32x512xf32>
    %19 = arith.mulf %8, %18 : vector<32x512xf32>
    %20 = arith.truncf %19 : vector<32x512xf32> to vector<32x512xbf16>
    %c0_9 = arith.constant 0 : index
    %c0_10 = arith.constant 0 : index
    %21 = vector.load %arg4[%c0_9, %c0_10] : memref<512x128xbf16, #tpu.memory_space<vmem>>, vector<512x128xbf16>
    %cst_11 = arith.constant dense<0.000000e+00> : vector<32x128xf32>
    %22 = tpu.matmul %20, %21, %cst_11 {dimension_numbers = #tpu.dot_dimension_numbers<[1], [0], [0], [1], [0, 0, 1, 1], [], []>} : vector<32x512xbf16>, vector<512x128xbf16>, vector<32x128xf32> -> vector<32x128xf32>
    %c0_12 = arith.constant 0 : index
    %c0_13 = arith.constant 0 : index
    %23 = vector.load %arg5[%c0_12, %c0_13] : memref<1x128xf32, #tpu.memory_space<vmem>>, vector<1x128xf32>
    %24 = vector.broadcast %23 : vector<1x128xf32> to vector<32x128xf32>
    %25 = arith.addf %22, %24 : vector<32x128xf32>
    %26 = arith.addf %0, %25 : vector<32x128xf32>
    %c0_14 = arith.constant 0 : index
    %c0_15 = arith.constant 0 : index
    %27 = vector.load %arg6[%c0_14, %c0_15] : memref<32x128xf32, #tpu.memory_space<vmem>>, vector<32x128xf32>
    tpu.vector_store %arg6[%c0_14, %c0_15], %26 {strides = array<i32>} : memref<32x128xf32, #tpu.memory_space<vmem>>, vector<32x128xf32>,
    return
  }
  func.func @transform_0(%arg0: i32) -> (i32, i32) {
    %c0_i32 = arith.constant 0 : i32
    %c0_i32_0 = arith.constant 0 : i32
    return %arg0, %c0_i32 : i32, i32
  }
  func.func @transform_1(%arg0: i32) -> (i32, i32) {
    %c0_i32 = arith.constant 0 : i32
    %c0_i32_0 = arith.constant 0 : i32
    %c0_i32_1 = arith.constant 0 : i32
    return %c0_i32, %c0_i32_0 : i32, i32
  }
  func.func @transform_2(%arg0: i32) -> (i32, i32) {
    %c0_i32 = arith.constant 0 : i32
    %c0_i32_0 = arith.constant 0 : i32
    %c0_i32_1 = arith.constant 0 : i32
    return %c0_i32, %c0_i32_0 : i32, i32
  }
  func.func @transform_3(%arg0: i32) -> (i32, i32) {
    %c0_i32 = arith.constant 0 : i32
    %c0_i32_0 = arith.constant 0 : i32
    %c0_i32_1 = arith.constant 0 : i32
    return %c0_i32, %c0_i32_0 : i32, i32
  }
  func.func @transform_4(%arg0: i32) -> (i32, i32) {
    %c0_i32 = arith.constant 0 : i32
    %c0_i32_0 = arith.constant 0 : i32
    %c0_i32_1 = arith.constant 0 : i32
    return %c0_i32, %c0_i32_0 : i32, i32
  }
  func.func @transform_5(%arg0: i32) -> (i32, i32) {
    %c0_i32 = arith.constant 0 : i32
    %c0_i32_0 = arith.constant 0 : i32
    return %arg0, %c0_i32 : i32, i32
  }
}

</mosaic_0001>

<llo_original>
// kernel: tpu_custom_call.1
$region0: #{tpu_custom_call.1}
  #allocation0 [shape = 'u32[]', space=smem, size = 0x4, offset = 0x4, fixed_abs, tag = 'smem constant byte address 0x4 - core index']
  #allocation1 [shape = 'u32[144,128]{1,0:T(1,128)}', space=vmem, size = 0x12000, scoped, tag = 'internal scratch']
  %s0 = inlined_call_operand.hbm [shape: f32[32,128], index: 0, kind: input, shape index: {}]
  %s1 = inlined_call_operand.hbm [shape: bf16[128,512], index: 1, kind: input, shape index: {}]
  %s2 = inlined_call_operand.vmem [shape: f32[1,512], index: 2, kind: input, shape index: {}]
  %s3 = inlined_call_operand.hbm [shape: bf16[512,128], index: 3, kind: input, shape index: {}]
  %s4 = inlined_call_operand.vmem [shape: f32[1,128], index: 4, kind: input, shape index: {}]
  %s5 = inlined_call_operand.hbm [shape: f32[32,128], index: 5, kind: output, shape index: {}]
  %s6 = sld [smem:[#allocation0]]
  $region42: #{tpu_custom_call.1} parent=0
    _
  %s8 = ssub.s32 1, %s6
  %s9 = scalar_select 0, %s8, %s6
  $region1: #{tpu_custom_call.1} parent=0
    #allocation2 [shape = 'u8[16384]{0}', space=vmem, size = 0x4000, scoped, tag = 'input window, operand 0, single buffered']
    #allocation3 [shape = 's32[1]{0}', space=sflag, size = 0x4, scoped, tag = 'scoped memory for tpu_custom_call.1']
    #allocation4 [shape = 's32[1]{0}', space=sflag, size = 0x4, scoped, tag = 'scoped memory for tpu_custom_call.1']
    #allocation5 [shape = 'u8[131072]{0}', space=vmem, size = 0x20000, scoped, tag = 'input window, operand 1, single buffered']
    #allocation6 [shape = 's32[1]{0}', space=sflag, size = 0x4, scoped, tag = 'scoped memory for tpu_custom_call.1']
    #allocation7 [shape = 'u8[131072]{0}', space=vmem, size = 0x20000, scoped, tag = 'input window, operand 3, single buffered']
    #allocation8 [shape = 'u8[16384]{0}', space=vmem, size = 0x4000, scoped, tag = 'output window, operand 0, single buffered']
    %10 = vsyncpa [#allocation3], 0
    %11 = vsyncpa [#allocation6], 0
    %12 = vsyncpa [#allocation4], 0
    // Predicated region
    $region2: #{tpu_custom_call.1} parent=1 // pred_check
      _
    $region3: #{tpu_custom_call.1} parent=1 // pred_check_branch
      %14 = sbr.rel (0) target = $region5
    $region4: #{tpu_custom_call.1} parent=1 // pred_region
      %s16 = ssub.s32 512, 512
      %17 = vsyncadd [#allocation3], %s16
      %s18 = sshll.u32 [#allocation2], 4
      %s19 = int_to_ptr.vmem [resolvable:$true] %s18
      %24 = dma.hbm_to_vmem [thread:$0]  %s0, 512, %s19, [#allocation3], 128, 128, 8
    $region5: #{tpu_custom_call.1} parent=1 // pred_fallthru
      _
    // Predicated region
    $region6: #{tpu_custom_call.1} parent=1 // pred_check
      _
    $region7: #{tpu_custom_call.1} parent=1 // pred_check_branch
      %26 = sbr.rel (0) target = $region9
    $region8: #{tpu_custom_call.1} parent=1 // pred_region
      %s28 = ssub.s32 4096, 4096
      %29 = vsyncadd [#allocation6], %s28
      %s30 = sshll.u32 [#allocation5], 4
      %s31 = int_to_ptr.vmem [resolvable:$true] %s30
      %36 = dma.hbm_to_vmem [thread:$0]  %s1, 4096, %s31, [#allocation6], 256, 256, 16
    $region9: #{tpu_custom_call.1} parent=1 // pred_fallthru
      _
    // Predicated region
    $region10: #{tpu_custom_call.1} parent=1 // pred_check
      _
    $region11: #{tpu_custom_call.1} parent=1 // pred_check_branch
      %38 = sbr.rel (0) target = $region13
    $region12: #{tpu_custom_call.1} parent=1 // pred_region
      _
    $region13: #{tpu_custom_call.1} parent=1 // pred_fallthru
      _
    // Predicated region
    $region14: #{tpu_custom_call.1} parent=1 // pred_check
      _
    $region15: #{tpu_custom_call.1} parent=1 // pred_check_branch
      %40 = sbr.rel (0) target = $region17
    $region16: #{tpu_custom_call.1} parent=1 // pred_region
      %s42 = ssub.s32 4096, 4096
      %43 = vsyncadd [#allocation6], %s42
      %s44 = sshll.u32 [#allocation7], 4
      %s45 = int_to_ptr.vmem [resolvable:$true] %s44
      %50 = dma.hbm_to_vmem [thread:$0]  %s3, 4096, %s45, [#allocation6], 64, 64, 4
    $region17: #{tpu_custom_call.1} parent=1 // pred_fallthru
      _
    // Predicated region
    $region18: #{tpu_custom_call.1} parent=1 // pred_check
      _
    $region19: #{tpu_custom_call.1} parent=1 // pred_check_branch
      %52 = sbr.rel (0) target = $region21
    $region20: #{tpu_custom_call.1} parent=1 // pred_region
      _
    $region21: #{tpu_custom_call.1} parent=1 // pred_fallthru
      _
    // Predicated region
    $region22: #{tpu_custom_call.1} parent=1 // pred_check
      _
    $region23: #{tpu_custom_call.1} parent=1 // pred_check_branch
      %54 = sbr.rel (0) target = $region25
    $region24: #{tpu_custom_call.1} parent=1 // pred_region
      %55 = dma.done [#allocation3], 512
    $region25: #{tpu_custom_call.1} parent=1 // pred_fallthru
      _
    // Predicated region
    $region26: #{tpu_custom_call.1} parent=1 // pred_check
      _
    $region27: #{tpu_custom_call.1} parent=1 // pred_check_branch
      %57 = sbr.rel (0) target = $region29
    $region28: #{tpu_custom_call.1} parent=1 // pred_region
      %58 = dma.done [#allocation6], 4096
    $region29: #{tpu_custom_call.1} parent=1 // pred_fallthru
      _
    // Predicated region
    $region30: #{tpu_custom_call.1} parent=1 // pred_check
      _
    $region31: #{tpu_custom_call.1} parent=1 // pred_check_branch
      %60 = sbr.rel (0) target = $region33
    $region32: #{tpu_custom_call.1} parent=1 // pred_region
      %61 = dma.done [#allocation6], 4096
    $region33: #{tpu_custom_call.1} parent=1 // pred_fallthru
      _
    %v63 = vld [vmem:[#allocation2] sm:$0xff]
    %v64 = vld [vmem:[#allocation2 + $0x8] sm:$0xff]
    %v65 = vld [vmem:[#allocation2 + $0x10] sm:$0xff]
    %v66 = vld [vmem:[#allocation2 + $0x18] sm:$0xff]
    %v67 = vpack.c.bf16 %v64, %v63
    %v68 = vpack.c.bf16 %v66, %v65
    %v69 = vld [vmem:[#allocation5] sm:$0xff]
    %v70 = vld [vmem:[#allocation5 + $0x8] sm:$0xff]
    %v71 = vld [vmem:[#allocation5 + $0x10] sm:$0xff]
    %v72 = vld [vmem:[#allocation5 + $0x18] sm:$0xff]
    %v73 = vld [vmem:[#allocation5 + $0x20] sm:$0xff]
    %v74 = vld [vmem:[#allocation5 + $0x28] sm:$0xff]
    %v75 = vld [vmem:[#allocation5 + $0x30] sm:$0xff]
    %v76 = vld [vmem:[#allocation5 + $0x38] sm:$0xff]
    %v77 = vld [vmem:[#allocation5 + $0x40] sm:$0xff]
    %v78 = vld [vmem:[#allocation5 + $0x48] sm:$0xff]
    %v79 = vld [vmem:[#allocation5 + $0x50] sm:$0xff]
    %v80 = vld [vmem:[#allocation5 + $0x58] sm:$0xff]
    %v81 = vld [vmem:[#allocation5 + $0x60] sm:$0xff]
    %v82 = vld [vmem:[#allocation5 + $0x68] sm:$0xff]
    %v83 = vld [vmem:[#allocation5 + $0x70] sm:$0xff]
    %v84 = vld [vmem:[#allocation5 + $0x78] sm:$0xff]
    %v85 = vld [vmem:[#allocation5 + $0x80] sm:$0xff]
    %v86 = vld [vmem:[#allocation5 + $0x88] sm:$0xff]
    %v87 = vld [vmem:[#allocation5 + $0x90] sm:$0xff]
    %v88 = vld [vmem:[#allocation5 + $0x98] sm:$0xff]
    %v89 = vld [vmem:[#allocation5 + $0xa0] sm:$0xff]
    %v90 = vld [vmem:[#allocation5 + $0xa8] sm:$0xff]
    %v91 = vld [vmem:[#allocation5 + $0xb0] sm:$0xff]
    %v92 = vld [vmem:[#allocation5 + $0xb8] sm:$0xff]
    %v93 = vld [vmem:[#allocation5 + $0xc0] sm:$0xff]
    %v94 = vld [vmem:[#allocation5 + $0xc8] sm:$0xff]
    %v95 = vld [vmem:[#allocation5 + $0xd0] sm:$0xff]
    %v96 = vld [vmem:[#allocation5 + $0xd8] sm:$0xff]
    %v97 = vld [vmem:[#allocation5 + $0xe0] sm:$0xff]
    %v98 = vld [vmem:[#allocation5 + $0xe8] sm:$0xff]
    %v99 = vld [vmem:[#allocation5 + $0xf0] sm:$0xff]
    %v100 = vld [vmem:[#allocation5 + $0xf8] sm:$0xff]
    %v101 = vld [vmem:[%s2] sm:$0xf]
    %v103 = vlaneseq
    %v104 = vshrl.u32 %v103, 7
    %v105 = vsub.s32 0, %v104
    %v106 = vrot.slane %v101, %v105
    %v107 = vlaneseq
    %v108 = vshrl.u32 %v107, 7
    %v109 = vsub.s32 1, %v108
    %v110 = vrot.slane %v101, %v109
    %v111 = vlaneseq
    %v112 = vshrl.u32 %v111, 7
    %v113 = vsub.s32 2, %v112
    %v114 = vrot.slane %v101, %v113
    %v115 = vlaneseq
    %v116 = vshrl.u32 %v115, 7
    %v117 = vsub.s32 3, %v116
    %v118 = vrot.slane %v101, %v117
    %v155 = vunpack.c.l.b16 %v69
    %v156 = vunpack.c.h.b16 %v69
    %v157 = vunpack.c.l.b16 %v70
    %v158 = vunpack.c.h.b16 %v70
    %v159 = vunpack.c.l.b16 %v71
    %v160 = vunpack.c.h.b16 %v71
    %v161 = vunpack.c.l.b16 %v72
    %v162 = vunpack.c.h.b16 %v72
    %v163 = vunpack.c.l.b16 %v73
    %v164 = vunpack.c.h.b16 %v73
    %v165 = vunpack.c.l.b16 %v74
    %v166 = vunpack.c.h.b16 %v74
    %v167 = vunpack.c.l.b16 %v75
    %v168 = vunpack.c.h.b16 %v75
    %v169 = vunpack.c.l.b16 %v76
    %v170 = vunpack.c.h.b16 %v76
    %v171 = vunpack.c.l.b16 %v77
    %v172 = vunpack.c.h.b16 %v77
    %v173 = vunpack.c.l.b16 %v78
    %v174 = vunpack.c.h.b16 %v78
    %v175 = vunpack.c.l.b16 %v79
    %v176 = vunpack.c.h.b16 %v79
    %v177 = vunpack.c.l.b16 %v80
    %v178 = vunpack.c.h.b16 %v80
    %v179 = vunpack.c.l.b16 %v81
    %v180 = vunpack.c.h.b16 %v81
    %v181 = vunpack.c.l.b16 %v82
    %v182 = vunpack.c.h.b16 %v82
    %v183 = vunpack.c.l.b16 %v83
    %v184 = vunpack.c.h.b16 %v83
    %v185 = vunpack.c.l.b16 %v84
    %v186 = vunpack.c.h.b16 %v84
    %v187 = vunpack.c.l.b16 %v85
    %v188 = vunpack.c.h.b16 %v85
    %v189 = vunpack.c.l.b16 %v86
    %v190 = vunpack.c.h.b16 %v86
    %v191 = vunpack.c.l.b16 %v87
    %v192 = vunpack.c.h.b16 %v87
    %v193 = vunpack.c.l.b16 %v88
    %v194 = vunpack.c.h.b16 %v88
    %v195 = vunpack.c.l.b16 %v89
    %v196 = vunpack.c.h.b16 %v89
    %v197 = vunpack.c.l.b16 %v90
    %v198 = vunpack.c.h.b16 %v90
    %v199 = vunpack.c.l.b16 %v91
    %v200 = vunpack.c.h.b16 %v91
    %v201 = vunpack.c.l.b16 %v92
    %v202 = vunpack.c.h.b16 %v92
    %v203 = vunpack.c.l.b16 %v93
    %v204 = vunpack.c.h.b16 %v93
    %v205 = vunpack.c.l.b16 %v94
    %v206 = vunpack.c.h.b16 %v94
    %v207 = vunpack.c.l.b16 %v95
    %v208 = vunpack.c.h.b16 %v95
    %v209 = vunpack.c.l.b16 %v96
    %v210 = vunpack.c.h.b16 %v96
    %v211 = vunpack.c.l.b16 %v97
    %v212 = vunpack.c.h.b16 %v97
    %v213 = vunpack.c.l.b16 %v98
    %v214 = vunpack.c.h.b16 %v98
    %v215 = vunpack.c.l.b16 %v99
    %v216 = vunpack.c.h.b16 %v99
    %v217 = vunpack.c.l.b16 %v100
    %v218 = vunpack.c.h.b16 %v100
    %v219 = vpack.c.b16 %v159, %v155
    %v220 = vpack.c.b16 %v160, %v156
    %v221 = vpack.c.b16 %v161, %v157
    %v222 = vpack.c.b16 %v162, %v158
    %v223 = vpack.c.b16 %v167, %v163
    %v224 = vpack.c.b16 %v168, %v164
    %v225 = vpack.c.b16 %v169, %v165
    %v226 = vpack.c.b16 %v170, %v166
    %v227 = vpack.c.b16 %v175, %v171
    %v228 = vpack.c.b16 %v176, %v172
    %v229 = vpack.c.b16 %v177, %v173
    %v230 = vpack.c.b16 %v178, %v174
    %v231 = vpack.c.b16 %v183, %v179
    %v232 = vpack.c.b16 %v184, %v180
    %v233 = vpack.c.b16 %v185, %v181
    %v234 = vpack.c.b16 %v186, %v182
    %v235 = vpack.c.b16 %v191, %v187
    %v236 = vpack.c.b16 %v192, %v188
    %v237 = vpack.c.b16 %v193, %v189
    %v238 = vpack.c.b16 %v194, %v190
    %v239 = vpack.c.b16 %v199, %v195
    %v240 = vpack.c.b16 %v200, %v196
    %v241 = vpack.c.b16 %v201, %v197
    %v242 = vpack.c.b16 %v202, %v198
    %v243 = vpack.c.b16 %v207, %v203
    %v244 = vpack.c.b16 %v208, %v204
    %v245 = vpack.c.b16 %v209, %v205
    %v246 = vpack.c.b16 %v210, %v206
    %v247 = vpack.c.b16 %v215, %v211
    %v248 = vpack.c.b16 %v216, %v212
    %v249 = vpack.c.b16 %v217, %v213
    %v250 = vpack.c.b16 %v218, %v214
    %283 = vmatprep.subr.bf16.mxu0 %v220
    %284 = vmatpush1.bf16.msra.mxu0 %v219
    %285 = vmatprep.subr.bf16.mxu0 %v224
    %286 = vmatpush1.bf16.msra.mxu0 %v223
    %287 = vmatprep.subr.bf16.mxu0 %v228
    %288 = vmatpush1.bf16.msra.mxu0 %v227
    %289 = vmatprep.subr.bf16.mxu0 %v232
    %290 = vmatpush1.bf16.msra.mxu0 %v231
    %291 = vmatprep.subr.bf16.mxu0 %v236
    %292 = vmatpush1.bf16.msra.mxu0 %v235
    %293 = vmatprep.subr.bf16.mxu0 %v240
    %294 = vmatpush1.bf16.msra.mxu0 %v239
    %295 = vmatprep.subr.bf16.mxu0 %v244
    %296 = vmatpush1.bf16.msra.mxu0 %v243
    %297 = vmatprep.subr.bf16.mxu0 %v248
    %298 = vmatpush1.bf16.msra.mxu0 %v247
    %299 = vmatprep.subr.bf16.mxu0 0
    %300 = vmatpush1.bf16.msra.mxu0 0
    %301 = vmatprep.subr.bf16.mxu0 0
    %302 = vmatpush1.bf16.msra.mxu0 0
    %303 = vmatprep.subr.bf16.mxu0 0
    %304 = vmatpush1.bf16.msra.mxu0 0
    %305 = vmatprep.subr.bf16.mxu0 0
    %306 = vmatpush1.bf16.msra.mxu0 0
    %307 = vmatprep.subr.bf16.mxu0 0
    %308 = vmatpush1.bf16.msra.mxu0 0
    %309 = vmatprep.subr.bf16.mxu0 0
    %310 = vmatpush1.bf16.msra.mxu0 0
    %311 = vmatprep.subr.bf16.mxu0 0
    %312 = vmatpush1.bf16.msra.mxu0 0
    %313 = vmatprep.subr.bf16.mxu0 0
    %314 = vmatpush1.bf16.msra.mxu0 0
    %315 = vmatprep.mubr.bf16.mxu0 0
    %316 = vmatmul.mubr.bf16.gmra.mrb[0].mxu0 %v67
    %v317 = vpop.f32.mrb[0].mxu0
    %v318 = vadd.f32 %v106, %v317
    %v319 = vpop.f32.mrb[0].mxu0
    %v320 = vadd.f32 %v110, %v319
    %v321 = vpop.f32.mrb[0].mxu0
    %v322 = vadd.f32 %v106, %v321
    %v323 = vpop.f32.mrb[0].mxu0
    %v324 = vadd.f32 %v110, %v323
    %325 = vmatprep.mubr.bf16.mxu0 0
    %326 = vmatmul.mubr.bf16.gmra.mrb[0].mxu0 %v68
    %v327 = vpop.f32.mrb[0].mxu0
    %v328 = vadd.f32 %v106, %v327
    %v329 = vpop.f32.mrb[0].mxu0
    %v330 = vadd.f32 %v110, %v329
    %v331 = vpop.f32.mrb[0].mxu0
    %v332 = vadd.f32 %v106, %v331
    %v333 = vpop.f32.mrb[0].mxu0
    %v334 = vadd.f32 %v110, %v333
    %335 = vdwg.mxu0
    %336 = vmatprep.subr.bf16.mxu0 %v222
    %337 = vmatpush1.bf16.msra.mxu0 %v221
    %338 = vmatprep.subr.bf16.mxu0 %v226
    %339 = vmatpush1.bf16.msra.mxu0 %v225
    %340 = vmatprep.subr.bf16.mxu0 %v230
    %341 = vmatpush1.bf16.msra.mxu0 %v229
    %342 = vmatprep.subr.bf16.mxu0 %v234
    %343 = vmatpush1.bf16.msra.mxu0 %v233
    %344 = vmatprep.subr.bf16.mxu0 %v238
    %345 = vmatpush1.bf16.msra.mxu0 %v237
    %346 = vmatprep.subr.bf16.mxu0 %v242
    %347 = vmatpush1.bf16.msra.mxu0 %v241
    %348 = vmatprep.subr.bf16.mxu0 %v246
    %349 = vmatpush1.bf16.msra.mxu0 %v245
    %350 = vmatprep.subr.bf16.mxu0 %v250
    %351 = vmatpush1.bf16.msra.mxu0 %v249
    %352 = vmatprep.subr.bf16.mxu0 0
    %353 = vmatpush1.bf16.msra.mxu0 0
    %354 = vmatprep.subr.bf16.mxu0 0
    %355 = vmatpush1.bf16.msra.mxu0 0
    %356 = vmatprep.subr.bf16.mxu0 0
    %357 = vmatpush1.bf16.msra.mxu0 0
    %358 = vmatprep.subr.bf16.mxu0 0
    %359 = vmatpush1.bf16.msra.mxu0 0
    %360 = vmatprep.subr.bf16.mxu0 0
    %361 = vmatpush1.bf16.msra.mxu0 0
    %362 = vmatprep.subr.bf16.mxu0 0
    %363 = vmatpush1.bf16.msra.mxu0 0
    %364 = vmatprep.subr.bf16.mxu0 0
    %365 = vmatpush1.bf16.msra.mxu0 0
    %366 = vmatprep.subr.bf16.mxu0 0
    %367 = vmatpush1.bf16.msra.mxu0 0
    %368 = vmatprep.mubr.bf16.mxu0 0
    %369 = vmatmul.mubr.bf16.gmra.mrb[0].mxu0 %v67
    %v370 = vpop.f32.mrb[0].mxu0
    %v371 = vadd.f32 %v114, %v370
    %v372 = vpop.f32.mrb[0].mxu0
    %v373 = vadd.f32 %v118, %v372
    %v374 = vpop.f32.mrb[0].mxu0
    %v375 = vadd.f32 %v114, %v374
    %v376 = vpop.f32.mrb[0].mxu0
    %v377 = vadd.f32 %v118, %v376
    %378 = vmatprep.mubr.bf16.mxu0 0
    %379 = vmatmul.mubr.bf16.gmra.mrb[0].mxu0 %v68
    %v380 = vpop.f32.mrb[0].mxu0
    %v381 = vadd.f32 %v114, %v380
    %v382 = vpop.f32.mrb[0].mxu0
    %v383 = vadd.f32 %v118, %v382
    %v384 = vpop.f32.mrb[0].mxu0
    %v385 = vadd.f32 %v114, %v384
    %v386 = vpop.f32.mrb[0].mxu0
    %v387 = vadd.f32 %v118, %v386
    %388 = vdwg.mxu0
    %v389 = vmul.f32 %v318, 0.5
    %v390 = vmul.f32 %v320, 0.5
    %v391 = vmul.f32 %v371, 0.5
    %v392 = vmul.f32 %v373, 0.5
    %v393 = vmul.f32 %v322, 0.5
    %v394 = vmul.f32 %v324, 0.5
    %v395 = vmul.f32 %v375, 0.5
    %v396 = vmul.f32 %v377, 0.5
    %v397 = vmul.f32 %v328, 0.5
    %v398 = vmul.f32 %v330, 0.5
    %v399 = vmul.f32 %v381, 0.5
    %v400 = vmul.f32 %v383, 0.5
    %v401 = vmul.f32 %v332, 0.5
    %v402 = vmul.f32 %v334, 0.5
    %v403 = vmul.f32 %v385, 0.5
    %v404 = vmul.f32 %v387, 0.5
    %v405 = vmul.f32 %v318, %v318
    %v406 = vmul.f32 %v320, %v320
    %v407 = vmul.f32 %v371, %v371
    %v408 = vmul.f32 %v373, %v373
    %v409 = vmul.f32 %v322, %v322
    %v410 = vmul.f32 %v324, %v324
    %v411 = vmul.f32 %v375, %v375
    %v412 = vmul.f32 %v377, %v377
    %v413 = vmul.f32 %v328, %v328
    %v414 = vmul.f32 %v330, %v330
    %v415 = vmul.f32 %v381, %v381
    %v416 = vmul.f32 %v383, %v383
    %v417 = vmul.f32 %v332, %v332
    %v418 = vmul.f32 %v334, %v334
    %v419 = vmul.f32 %v385, %v385
    %v420 = vmul.f32 %v387, %v387
    %v421 = vmul.f32 %v405, %v318
    %v422 = vmul.f32 %v406, %v320
    %v423 = vmul.f32 %v407, %v371
    %v424 = vmul.f32 %v408, %v373
    %v425 = vmul.f32 %v409, %v322
    %v426 = vmul.f32 %v410, %v324
    %v427 = vmul.f32 %v411, %v375
    %v428 = vmul.f32 %v412, %v377
    %v429 = vmul.f32 %v413, %v328
    %v430 = vmul.f32 %v414, %v330
    %v431 = vmul.f32 %v415, %v381
    %v432 = vmul.f32 %v416, %v383
    %v433 = vmul.f32 %v417, %v332
    %v434 = vmul.f32 %v418, %v334
    %v435 = vmul.f32 %v419, %v385
    %v436 = vmul.f32 %v420, %v387
    %v437 = vmul.f32 %v421, 0.044715
    %v438 = vmul.f32 %v422, 0.044715
    %v439 = vmul.f32 %v423, 0.044715
    %v440 = vmul.f32 %v424, 0.044715
    %v441 = vmul.f32 %v425, 0.044715
    %v442 = vmul.f32 %v426, 0.044715
    %v443 = vmul.f32 %v427, 0.044715
    %v444 = vmul.f32 %v428, 0.044715
    %v445 = vmul.f32 %v429, 0.044715
    %v446 = vmul.f32 %v430, 0.044715
    %v447 = vmul.f32 %v431, 0.044715
    %v448 = vmul.f32 %v432, 0.044715
    %v449 = vmul.f32 %v433, 0.044715
    %v450 = vmul.f32 %v434, 0.044715
    %v451 = vmul.f32 %v435, 0.044715
    %v452 = vmul.f32 %v436, 0.044715
    %v453 = vadd.f32 %v318, %v437
    %v454 = vadd.f32 %v320, %v438
    %v455 = vadd.f32 %v371, %v439
    %v456 = vadd.f32 %v373, %v440
    %v457 = vadd.f32 %v322, %v441
    %v458 = vadd.f32 %v324, %v442
    %v459 = vadd.f32 %v375, %v443
    %v460 = vadd.f32 %v377, %v444
    %v461 = vadd.f32 %v328, %v445
    %v462 = vadd.f32 %v330, %v446
    %v463 = vadd.f32 %v381, %v447
    %v464 = vadd.f32 %v383, %v448
    %v465 = vadd.f32 %v332, %v449
    %v466 = vadd.f32 %v334, %v450
    %v467 = vadd.f32 %v385, %v451
    %v468 = vadd.f32 %v387, %v452
    %v469 = vmul.f32 %v453, 0.7978846
    %v470 = vmul.f32 %v454, 0.7978846
    %v471 = vmul.f32 %v455, 0.7978846
    %v472 = vmul.f32 %v456, 0.7978846
    %v473 = vmul.f32 %v457, 0.7978846
    %v474 = vmul.f32 %v458, 0.7978846
    %v475 = vmul.f32 %v459, 0.7978846
    %v476 = vmul.f32 %v460, 0.7978846
    %v477 = vmul.f32 %v461, 0.7978846
    %v478 = vmul.f32 %v462, 0.7978846
    %v479 = vmul.f32 %v463, 0.7978846
    %v480 = vmul.f32 %v464, 0.7978846
    %v481 = vmul.f32 %v465, 0.7978846
    %v482 = vmul.f32 %v466, 0.7978846
    %v483 = vmul.f32 %v467, 0.7978846
    %v484 = vmul.f32 %v468, 0.7978846
    %v485 = vtanh.pop %v469
    %v486 = vtanh.pop %v470
    %v487 = vtanh.pop %v471
    %v488 = vtanh.pop %v472
    %v489 = vtanh.pop %v473
    %v490 = vtanh.pop %v474
    %v491 = vtanh.pop %v475
    %v492 = vtanh.pop %v476
    %v493 = vtanh.pop %v477
    %v494 = vtanh.pop %v478
    %v495 = vtanh.pop %v479
    %v496 = vtanh.pop %v480
    %v497 = vtanh.pop %v481
    %v498 = vtanh.pop %v482
    %v499 = vtanh.pop %v483
    %v500 = vtanh.pop %v484
    %v501 = vadd.f32 %v485, 1.0
    %v502 = vadd.f32 %v486, 1.0
    %v503 = vadd.f32 %v487, 1.0
    %v504 = vadd.f32 %v488, 1.0
    %v505 = vadd.f32 %v489, 1.0
    %v506 = vadd.f32 %v490, 1.0
    %v507 = vadd.f32 %v491, 1.0
    %v508 = vadd.f32 %v492, 1.0
    %v509 = vadd.f32 %v493, 1.0
    %v510 = vadd.f32 %v494, 1.0
    %v511 = vadd.f32 %v495, 1.0
    %v512 = vadd.f32 %v496, 1.0
    %v513 = vadd.f32 %v497, 1.0
    %v514 = vadd.f32 %v498, 1.0
    %v515 = vadd.f32 %v499, 1.0
    %v516 = vadd.f32 %v500, 1.0
    %v517 = vmul.f32 %v389, %v501
    %v518 = vmul.f32 %v390, %v502
    %v519 = vmul.f32 %v391, %v503
    %v520 = vmul.f32 %v392, %v504
    %v521 = vmul.f32 %v393, %v505
    %v522 = vmul.f32 %v394, %v506
    %v523 = vmul.f32 %v395, %v507
    %v524 = vmul.f32 %v396, %v508
    %v525 = vmul.f32 %v397, %v509
    %v526 = vmul.f32 %v398, %v510
    %v527 = vmul.f32 %v399, %v511
    %v528 = vmul.f32 %v400, %v512
    %v529 = vmul.f32 %v401, %v513
    %v530 = vmul.f32 %v402, %v514
    %v531 = vmul.f32 %v403, %v515
    %v532 = vmul.f32 %v404, %v516
    %v533 = vpack.c.bf16 %v521, %v517
    %v534 = vpack.c.bf16 %v522, %v518
    %v535 = vpack.c.bf16 %v523, %v519
    %v536 = vpack.c.bf16 %v524, %v520
    %v537 = vpack.c.bf16 %v529, %v525
    %v538 = vpack.c.bf16 %v530, %v526
    %v539 = vpack.c.bf16 %v531, %v527
    %v540 = vpack.c.bf16 %v532, %v528
    %v541 = vld [vmem:[#allocation7] sm:$0xf]
    %v542 = vld [vmem:[#allocation7 + $0x4] sm:$0xf]
    %v543 = vld [vmem:[#allocation7 + $0x8] sm:$0xf]
    %v544 = vld [vmem:[#allocation7 + $0xc] sm:$0xf]
    %v545 = vld [vmem:[#allocation7 + $0x10] sm:$0xf]
    %v546 = vld [vmem:[#allocation7 + $0x14] sm:$0xf]
    %v547 = vld [vmem:[#allocation7 + $0x18] sm:$0xf]
    %v548 = vld [vmem:[#allocation7 + $0x1c] sm:$0xf]
    %v549 = vld [vmem:[#allocation7 + $0x20] sm:$0xf]
    %v550 = vld [vmem:[#allocation7 + $0x24] sm:$0xf]
    %v551 = vld [vmem:[#allocation7 + $0x28] sm:$0xf]
    %v552 = vld [vmem:[#allocation7 + $0x2c] sm:$0xf]
    %v553 = vld [vmem:[#allocation7 + $0x30] sm:$0xf]
    %v554 = vld [vmem:[#allocation7 + $0x34] sm:$0xf]
    %v555 = vld [vmem:[#allocation7 + $0x38] sm:$0xf]
    %v556 = vld [vmem:[#allocation7 + $0x3c] sm:$0xf]
    %v557 = vld [vmem:[#allocation7 + $0x40] sm:$0xf]
    %v558 = vld [vmem:[#allocation7 + $0x44] sm:$0xf]
    %v559 = vld [vmem:[#allocation7 + $0x48] sm:$0xf]
    %v560 = vld [vmem:[#allocation7 + $0x4c] sm:$0xf]
    %v561 = vld [vmem:[#allocation7 + $0x50] sm:$0xf]
    %v562 = vld [vmem:[#allocation7 + $0x54] sm:$0xf]
    %v563 = vld [vmem:[#allocation7 + $0x58] sm:$0xf]
    %v564 = vld [vmem:[#allocation7 + $0x5c] sm:$0xf]
    %v565 = vld [vmem:[#allocation7 + $0x60] sm:$0xf]
    %v566 = vld [vmem:[#allocation7 + $0x64] sm:$0xf]
    %v567 = vld [vmem:[#allocation7 + $0x68] sm:$0xf]
    %v568 = vld [vmem:[#allocation7 + $0x6c] sm:$0xf]
    %v569 = vld [vmem:[#allocation7 + $0x70] sm:$0xf]
    %v570 = vld [vmem:[#allocation7 + $0x74] sm:$0xf]
    %v571 = vld [vmem:[#allocation7 + $0x78] sm:$0xf]
    %v572 = vld [vmem:[#allocation7 + $0x7c] sm:$0xf]
    %v573 = vld [vmem:[#allocation7 + $0x80] sm:$0xf]
    %v574 = vld [vmem:[#allocation7 + $0x84] sm:$0xf]
    %v575 = vld [vmem:[#allocation7 + $0x88] sm:$0xf]
    %v576 = vld [vmem:[#allocation7 + $0x8c] sm:$0xf]
    %v577 = vld [vmem:[#allocation7 + $0x90] sm:$0xf]
    %v578 = vld [vmem:[#allocation7 + $0x94] sm:$0xf]
    %v579 = vld [vmem:[#allocation7 + $0x98] sm:$0xf]
    %v580 = vld [vmem:[#allocation7 + $0x9c] sm:$0xf]
    %v581 = vld [vmem:[#allocation7 + $0xa0] sm:$0xf]
    %v582 = vld [vmem:[#allocation7 + $0xa4] sm:$0xf]
    %v583 = vld [vmem:[#allocation7 + $0xa8] sm:$0xf]
    %v584 = vld [vmem:[#allocation7 + $0xac] sm:$0xf]
    %v585 = vld [vmem:[#allocation7 + $0xb0] sm:$0xf]
    %v586 = vld [vmem:[#allocation7 + $0xb4] sm:$0xf]
    %v587 = vld [vmem:[#allocation7 + $0xb8] sm:$0xf]
    %v588 = vld [vmem:[#allocation7 + $0xbc] sm:$0xf]
    %v589 = vld [vmem:[#allocation7 + $0xc0] sm:$0xf]
    %v590 = vld [vmem:[#allocation7 + $0xc4] sm:$0xf]
    %v591 = vld [vmem:[#allocation7 + $0xc8] sm:$0xf]
    %v592 = vld [vmem:[#allocation7 + $0xcc] sm:$0xf]
    %v593 = vld [vmem:[#allocation7 + $0xd0] sm:$0xf]
    %v594 = vld [vmem:[#allocation7 + $0xd4] sm:$0xf]
    %v595 = vld [vmem:[#allocation7 + $0xd8] sm:$0xf]
    %v596 = vld [vmem:[#allocation7 + $0xdc] sm:$0xf]
    %v597 = vld [vmem:[#allocation7 + $0xe0] sm:$0xf]
    %v598 = vld [vmem:[#allocation7 + $0xe4] sm:$0xf]
    %v599 = vld [vmem:[#allocation7 + $0xe8] sm:$0xf]
    %v600 = vld [vmem:[#allocation7 + $0xec] sm:$0xf]
    %v601 = vld [vmem:[#allocation7 + $0xf0] sm:$0xf]
    %v602 = vld [vmem:[#allocation7 + $0xf4] sm:$0xf]
    %v603 = vld [vmem:[#allocation7 + $0xf8] sm:$0xf]
    %v604 = vld [vmem:[#allocation7 + $0xfc] sm:$0xf]
    %v605 = vld [vmem:[%s4] sm:$0x1]
    %v607 = vlaneseq
    %v608 = vshrl.u32 %v607, 7
    %v609 = vsub.s32 0, %v608
    %v610 = vrot.slane %v605, %v609
    %v676 = vunpack.c.l.b16 %v541
    %v677 = vunpack.c.l.b16 %v542
    %v678 = vunpack.c.l.b16 %v543
    %v679 = vunpack.c.l.b16 %v544
    %v680 = vunpack.c.l.b16 %v545
    %v681 = vunpack.c.l.b16 %v546
    %v682 = vunpack.c.l.b16 %v547
    %v683 = vunpack.c.l.b16 %v548
    %v684 = vunpack.c.l.b16 %v549
    %v685 = vunpack.c.l.b16 %v550
    %v686 = vunpack.c.l.b16 %v551
    %v687 = vunpack.c.l.b16 %v552
    %v688 = vunpack.c.l.b16 %v553
    %v689 = vunpack.c.l.b16 %v554
    %v690 = vunpack.c.l.b16 %v555
    %v691 = vunpack.c.l.b16 %v556
    %v692 = vunpack.c.l.b16 %v557
    %v693 = vunpack.c.l.b16 %v558
    %v694 = vunpack.c.l.b16 %v559
    %v695 = vunpack.c.l.b16 %v560
    %v696 = vunpack.c.l.b16 %v561
    %v697 = vunpack.c.l.b16 %v562
    %v698 = vunpack.c.l.b16 %v563
    %v699 = vunpack.c.l.b16 %v564
    %v700 = vunpack.c.l.b16 %v565
    %v701 = vunpack.c.l.b16 %v566
    %v702 = vunpack.c.l.b16 %v567
    %v703 = vunpack.c.l.b16 %v568
    %v704 = vunpack.c.l.b16 %v569
    %v705 = vunpack.c.l.b16 %v570
    %v706 = vunpack.c.l.b16 %v571
    %v707 = vunpack.c.l.b16 %v572
    %v708 = vunpack.c.l.b16 %v573
    %v709 = vunpack.c.l.b16 %v574
    %v710 = vunpack.c.l.b16 %v575
    %v711 = vunpack.c.l.b16 %v576
    %v712 = vunpack.c.l.b16 %v577
    %v713 = vunpack.c.l.b16 %v578
    %v714 = vunpack.c.l.b16 %v579
    %v715 = vunpack.c.l.b16 %v580
    %v716 = vunpack.c.l.b16 %v581
    %v717 = vunpack.c.l.b16 %v582
    %v718 = vunpack.c.l.b16 %v583
    %v719 = vunpack.c.l.b16 %v584
    %v720 = vunpack.c.l.b16 %v585
    %v721 = vunpack.c.l.b16 %v586
    %v722 = vunpack.c.l.b16 %v587
    %v723 = vunpack.c.l.b16 %v588
    %v724 = vunpack.c.l.b16 %v589
    %v725 = vunpack.c.l.b16 %v590
    %v726 = vunpack.c.l.b16 %v591
    %v727 = vunpack.c.l.b16 %v592
    %v728 = vunpack.c.l.b16 %v593
    %v729 = vunpack.c.l.b16 %v594
    %v730 = vunpack.c.l.b16 %v595
    %v731 = vunpack.c.l.b16 %v596
    %v732 = vunpack.c.l.b16 %v597
    %v733 = vunpack.c.l.b16 %v598
    %v734 = vunpack.c.l.b16 %v599
    %v735 = vunpack.c.l.b16 %v600
    %v736 = vunpack.c.l.b16 %v601
    %v737 = vunpack.c.l.b16 %v602
    %v738 = vunpack.c.l.b16 %v603
    %v739 = vunpack.c.l.b16 %v604
    %v740 = vpack.c.b16 %v677, %v676
    %v741 = vpack.c.b16 %v679, %v678
    %v742 = vpack.c.b16 %v681, %v680
    %v743 = vpack.c.b16 %v683, %v682
    %v744 = vpack.c.b16 %v685, %v684
    %v745 = vpack.c.b16 %v687, %v686
    %v746 = vpack.c.b16 %v689, %v688
    %v747 = vpack.c.b16 %v691, %v690
    %v748 = vpack.c.b16 %v693, %v692
    %v749 = vpack.c.b16 %v695, %v694
    %v750 = vpack.c.b16 %v697, %v696
    %v751 = vpack.c.b16 %v699, %v698
    %v752 = vpack.c.b16 %v701, %v700
    %v753 = vpack.c.b16 %v703, %v702
    %v754 = vpack.c.b16 %v705, %v704
    %v755 = vpack.c.b16 %v707, %v706
    %v756 = vpack.c.b16 %v709, %v708
    %v757 = vpack.c.b16 %v711, %v710
    %v758 = vpack.c.b16 %v713, %v712
    %v759 = vpack.c.b16 %v715, %v714
    %v760 = vpack.c.b16 %v717, %v716
    %v761 = vpack.c.b16 %v719, %v718
    %v762 = vpack.c.b16 %v721, %v720
    %v763 = vpack.c.b16 %v723, %v722
    %v764 = vpack.c.b16 %v725, %v724
    %v765 = vpack.c.b16 %v727, %v726
    %v766 = vpack.c.b16 %v729, %v728
    %v767 = vpack.c.b16 %v731, %v730
    %v768 = vpack.c.b16 %v733, %v732
    %v769 = vpack.c.b16 %v735, %v734
    %v770 = vpack.c.b16 %v737, %v736
    %v771 = vpack.c.b16 %v739, %v738
    %804 = vmatprep.subr.bf16.mxu0 0
    %805 = vmatpush1.bf16.msra.mxu0 %v740
    %806 = vmatprep.subr.bf16.mxu0 0
    %807 = vmatpush1.bf16.msra.mxu0 %v741
    %808 = vmatprep.subr.bf16.mxu0 0
    %809 = vmatpush1.bf16.msra.mxu0 %v742
    %810 = vmatprep.subr.bf16.mxu0 0
    %811 = vmatpush1.bf16.msra.mxu0 %v743
    %812 = vmatprep.subr.bf16.mxu0 0
    %813 = vmatpush1.bf16.msra.mxu0 %v744
    %814 = vmatprep.subr.bf16.mxu0 0
    %815 = vmatpush1.bf16.msra.mxu0 %v745
    %816 = vmatprep.subr.bf16.mxu0 0
    %817 = vmatpush1.bf16.msra.mxu0 %v746
    %818 = vmatprep.subr.bf16.mxu0 0
    %819 = vmatpush1.bf16.msra.mxu0 %v747
    %820 = vmatprep.subr.bf16.mxu0 0
    %821 = vmatpush1.bf16.msra.mxu0 %v748
    %822 = vmatprep.subr.bf16.mxu0 0
    %823 = vmatpush1.bf16.msra.mxu0 %v749
    %824 = vmatprep.subr.bf16.mxu0 0
    %825 = vmatpush1.bf16.msra.mxu0 %v750
    %826 = vmatprep.subr.bf16.mxu0 0
    %827 = vmatpush1.bf16.msra.mxu0 %v751
    %828 = vmatprep.subr.bf16.mxu0 0
    %829 = vmatpush1.bf16.msra.mxu0 %v752
    %830 = vmatprep.subr.bf16.mxu0 0
    %831 = vmatpush1.bf16.msra.mxu0 %v753
    %832 = vmatprep.subr.bf16.mxu0 0
    %833 = vmatpush1.bf16.msra.mxu0 %v754
    %834 = vmatprep.subr.bf16.mxu0 0
    %835 = vmatpush1.bf16.msra.mxu0 %v755
    %836 = vmatprep.mubr.bf16.mxu0 %v534
    %837 = vmatmul.mubr.bf16.gmra.mrb[0].mxu0 %v533
    %v838 = vpop.f32.mrb[0].mxu0
    %v839 = vadd.f32 %v610, %v838
    %v840 = vpop.f32.mrb[0].mxu0
    %v841 = vpop.f32.mrb[0].mxu0
    %v842 = vadd.f32 %v610, %v841
    %v843 = vpop.f32.mrb[0].mxu0
    %844 = vmatprep.mubr.bf16.mxu0 %v538
    %845 = vmatmul.mubr.bf16.gmra.mrb[0].mxu0 %v537
    %v846 = vpop.f32.mrb[0].mxu0
    %v847 = vadd.f32 %v610, %v846
    %v848 = vpop.f32.mrb[0].mxu0
    %v849 = vpop.f32.mrb[0].mxu0
    %v850 = vadd.f32 %v610, %v849
    %v851 = vpop.f32.mrb[0].mxu0
    %852 = vdwg.mxu0
    %853 = vmatprep.subr.bf16.mxu0 0
    %854 = vmatpush1.bf16.msra.mxu0 %v756
    %855 = vmatprep.subr.bf16.mxu0 0
    %856 = vmatpush1.bf16.msra.mxu0 %v757
    %857 = vmatprep.subr.bf16.mxu0 0
    %858 = vmatpush1.bf16.msra.mxu0 %v758
    %859 = vmatprep.subr.bf16.mxu0 0
    %860 = vmatpush1.bf16.msra.mxu0 %v759
    %861 = vmatprep.subr.bf16.mxu0 0
    %862 = vmatpush1.bf16.msra.mxu0 %v760
    %863 = vmatprep.subr.bf16.mxu0 0
    %864 = vmatpush1.bf16.msra.mxu0 %v761
    %865 = vmatprep.subr.bf16.mxu0 0
    %866 = vmatpush1.bf16.msra.mxu0 %v762
    %867 = vmatprep.subr.bf16.mxu0 0
    %868 = vmatpush1.bf16.msra.mxu0 %v763
    %869 = vmatprep.subr.bf16.mxu0 0
    %870 = vmatpush1.bf16.msra.mxu0 %v764
    %871 = vmatprep.subr.bf16.mxu0 0
    %872 = vmatpush1.bf16.msra.mxu0 %v765
    %873 = vmatprep.subr.bf16.mxu0 0
    %874 = vmatpush1.bf16.msra.mxu0 %v766
    %875 = vmatprep.subr.bf16.mxu0 0
    %876 = vmatpush1.bf16.msra.mxu0 %v767
    %877 = vmatprep.subr.bf16.mxu0 0
    %878 = vmatpush1.bf16.msra.mxu0 %v768
    %879 = vmatprep.subr.bf16.mxu0 0
    %880 = vmatpush1.bf16.msra.mxu0 %v769
    %881 = vmatprep.subr.bf16.mxu0 0
    %882 = vmatpush1.bf16.msra.mxu0 %v770
    %883 = vmatprep.subr.bf16.mxu0 0
    %884 = vmatpush1.bf16.msra.mxu0 %v771
    %885 = vmatprep.mubr.bf16.mxu0 %v536
    %886 = vmatmul.mubr.bf16.gmra.mrb[0].mxu0 %v535
    %v887 = vpop.f32.mrb[0].mxu0
    %v888 = vadd.f32 %v839, %v887
    %v889 = vpop.f32.mrb[0].mxu0
    %v890 = vpop.f32.mrb[0].mxu0
    %v891 = vadd.f32 %v842, %v890
    %v892 = vpop.f32.mrb[0].mxu0
    %893 = vmatprep.mubr.bf16.mxu0 %v540
    %894 = vmatmul.mubr.bf16.gmra.mrb[0].mxu0 %v539
    %v895 = vpop.f32.mrb[0].mxu0
    %v896 = vadd.f32 %v847, %v895
    %v897 = vpop.f32.mrb[0].mxu0
    %v898 = vpop.f32.mrb[0].mxu0
    %v899 = vadd.f32 %v850, %v898
    %v900 = vpop.f32.mrb[0].mxu0
    %901 = vdwg.mxu0
    %v902 = vadd.f32 %v63, %v888
    %v903 = vadd.f32 %v64, %v891
    %v904 = vadd.f32 %v65, %v896
    %v905 = vadd.f32 %v66, %v899
    %906 = vst [vmem:[#allocation8] sm:$0xff] %v902
    %907 = vst [vmem:[#allocation8 + $0x8] sm:$0xff] %v903
    %908 = vst [vmem:[#allocation8 + $0x10] sm:$0xff] %v904
    %909 = vst [vmem:[#allocation8 + $0x18] sm:$0xff] %v905
    // Predicated region
    $region34: #{tpu_custom_call.1} parent=1 // pred_check
      _
    $region35: #{tpu_custom_call.1} parent=1 // pred_check_branch
      %911 = sbr.rel (0) target = $region37
    $region36: #{tpu_custom_call.1} parent=1 // pred_region
      %s913 = ssub.s32 512, 512
      %914 = vsyncadd [#allocation4], %s913
      %s915 = sshll.u32 [#allocation8], 4
      %s916 = int_to_ptr.vmem [resolvable:$true] %s915
      %921 = dma.vmem_to_hbm [thread:$0]  %s916, 512, %s5, [#allocation4], 128, 128, 8
    $region37: #{tpu_custom_call.1} parent=1 // pred_fallthru
      _
    // Predicated region
    $region38: #{tpu_custom_call.1} parent=1 // pred_check
      _
    $region39: #{tpu_custom_call.1} parent=1 // pred_check_branch
      %923 = sbr.rel (0) target = $region41
    $region40: #{tpu_custom_call.1} parent=1 // pred_region
      %924 = dma.done [#allocation4], 512
    $region41: #{tpu_custom_call.1} parent=1 // pred_fallthru
      _
    %925 = vsyncpa [#allocation3], 1
    %926 = vsyncpa [#allocation6], 1
    %927 = vsyncpa [#allocation4], 1

</llo_original>
